<compile_context>
chip_gen: v7x
topology: tpu7x:2x2x1
jax: 0.10.0
libtpu: 0.0.40
codegen_flags: <defaults>
</compile_context>

<pallas_src>
import jax
import jax.numpy as jnp
from jax.experimental import pallas as pl
from jax.experimental.pallas import tpu as pltpu

LN_EPS = 1e-5  # torch.nn.LayerNorm default


def _round_up(a: int, b: int) -> int:
    return (a + b - 1) // b * b


def _sublane(dtype) -> int:
    # Rows per vreg tile: 8 for 4-byte dtypes, 16 for bf16/f16, 32 for int8.
    return max(8, 32 // jnp.dtype(dtype).itemsize)


def _vmem_budget_bytes() -> int:
    """Usable scoped-VMEM budget: ~85% of physical, leaving headroom for
    Mosaic internal scratch (~108 MiB on 128 MiB v5e/v6e, ~52 MiB on v7x)."""
    physical = 64 * 1024 * 1024  # conservative default (v7x per-TC VMEM)
    try:
        info = pltpu.get_tpu_info()
        physical = int(getattr(info, "vmem_capacity_bytes", physical))
    except Exception:
        # Hardware query unavailable (e.g. interpret mode); keep the
        # conservative 64 MiB default, which is safe on every generation.
        pass
    return min(int(physical * 0.85), physical - 12 * 1024 * 1024)


def _pick_row_tile(M: int, sub: int) -> int:
    """Row tile balancing padding waste, per-grid-step overhead (~0.35 us per
    step ~ a few tens of rows of work) and >=2 row tiles for v7x megacore."""
    best_c, best_cost = sub, None
    for c in (1024, 512, 256, 128, 64, 32, 16, 8):
        if c % sub:
            continue
        n_i = -(-M // c)
        mp = n_i * c
        cost = mp + 64 * n_i          # padded rows + per-grid-step overhead
        if n_i == 1 and M > sub:
            cost += mp // 2           # one v7x TensorCore would sit idle
        if best_cost is None or cost < best_cost:
            best_c, best_cost = c, cost
    return best_c


def _select_tiles(M, D, H, in_dtype, out_dtype, w_dtype, budget,
                  row_tile, h_tile):
    """Pick (tm, th).  Prefer resident weights (th=H); otherwise stream the
    largest H chunk that fits, shrinking tm only as a last resort."""
    sub = _sublane(in_dtype)
    in_b = jnp.dtype(in_dtype).itemsize
    out_b = jnp.dtype(out_dtype).itemsize
    w_b = jnp.dtype(w_dtype).itemsize
    acc_in_output = jnp.dtype(out_dtype) == jnp.dtype(jnp.float32)
    cast_needed = jnp.dtype(w_dtype) != jnp.dtype(in_dtype)

    def footprint(tm, th):
        n_j = H // th
        f = 2 * tm * D * in_b                  # x tiles (double-buffered)
        f += 2 * tm * D * out_b                # output tiles
        if not acc_in_output:
            f += tm * D * 4                    # separate f32 accumulator
        if cast_needed and n_j > 1:
            f += tm * D * w_b                  # hoisted x-cast scratch
        f += 2 * (D * th + th * D) * w_b       # W1/W2 blocks (double-buffered)
        f += 2 * (th + 3 * D) * 4              # b1 chunk + b2/gamma/beta
        f += tm * th * 4 + tm * D * 4          # ReLU intermediate + slack
        return f

    if row_tile is not None:
        assert row_tile % sub == 0, (
            f"row_tile must be a multiple of {sub} for "
            f"{jnp.dtype(in_dtype).name} activations")
        tm = row_tile
    else:
        tm = _pick_row_tile(M, sub)

    if h_tile is not None:
        assert h_tile == H or (H % h_tile == 0 and h_tile % 128 == 0), \
            "h_tile must divide hidden and be a multiple of 128"
        return tm, h_tile

    ths = [H] + [t for t in (8192, 4096, 2048, 1024, 512, 256, 128)
                 if t < H and H % t == 0]
    while True:
        for th in ths:
            if footprint(tm, th) <= budget:
                return tm, th
        if row_tile is not None or tm <= sub:
            # Smallest configuration; if it truly does not fit the compiler
            # will report the VMEM overflow explicitly (no silent fallback).
            return tm, ths[-1]
        tm = max(sub, tm // 2)


def _make_ffn_kernel(acc_in_output: bool, hoist_x_cast: bool):
    """Build the fused FFN kernel body, specialized on two layout choices."""

    def ffn_kernel(x_ref, w1_ref, b1_ref, w2_ref, b2_ref, gamma_ref, beta_ref,
                   o_ref, *scratch):
        idx = 0
        if acc_in_output:
            acc_ref = o_ref                    # f32 output block doubles as acc
        else:
            acc_ref = scratch[idx]             # separate f32 accumulator
            idx += 1
        xmm_ref = None
        if hoist_x_cast:
            xmm_ref = scratch[idx]             # x cast once per row tile
            idx += 1

        j = pl.program_id(1)
        nj = pl.num_programs(1)

        @pl.when(j == 0)
        def _init():
            acc_ref[...] = jnp.zeros_like(acc_ref)
            if hoist_x_cast:
                xmm_ref[...] = x_ref[...].astype(xmm_ref.dtype)

        if hoist_x_cast:
            x_mm = xmm_ref[...]
        else:
            x_mm = x_ref[...].astype(w1_ref.dtype)   # no-op if dtypes match

        # Conv1d(d_model -> hidden, k=1) chunk on the MXU, f32 accumulation.
        h = jnp.dot(x_mm, w1_ref[...], preferred_element_type=jnp.float32)
        h = jnp.maximum(h + b1_ref[...].astype(jnp.float32), 0.0)  # bias+ReLU

        # Conv1d(hidden -> d_model, k=1) chunk, accumulated over H chunks.
        acc_ref[...] += jnp.dot(h.astype(w2_ref.dtype), w2_ref[...],
                                preferred_element_type=jnp.float32)

        @pl.when(j == nj - 1)
        def _epilogue():
            # Dropout: nn.Dropout() is identity in eval mode.
            # TODO(synk): training-mode dropout (p=0.5) via pltpu.prng_* not implemented.
            b2 = b2_ref[...].astype(jnp.float32)
            gamma = gamma_ref[...].astype(jnp.float32)
            beta = beta_ref[...].astype(jnp.float32)

            z = x_ref[...].astype(jnp.float32) + acc_ref[...] + b2  # residual
            inv_d = 1.0 / z.shape[-1]
            mean = jnp.sum(z, axis=-1, keepdims=True) * inv_d
            centered = z - mean
            var = jnp.sum(centered * centered, axis=-1, keepdims=True) * inv_d
            zn = centered * jax.lax.rsqrt(var + LN_EPS)
            o_ref[...] = (zn * gamma + beta).astype(o_ref.dtype)

    return ffn_kernel


def _build_ffn_call(Mp, D, H, tm, th, in_dtype, w_dtype, out_dtype,
                    acc_in_output, hoist_x_cast, vmem_limit):
    n_i = Mp // tm
    n_j = H // th

    in_b = jnp.dtype(in_dtype).itemsize
    out_b = jnp.dtype(out_dtype).itemsize
    w_b = jnp.dtype(w_dtype).itemsize

    # Resident weights (th == H, constant index map) are fetched once for the
    # whole grid; streamed weights are re-fetched once per row tile.
    weight_passes = 1 if n_j == 1 else n_i
    cost = pl.CostEstimate(
        flops=4 * Mp * D * H,                         # the two matmuls
        transcendentals=Mp,                           # one rsqrt per row
        bytes_accessed=int(Mp * D * (in_b + out_b)
                           + weight_passes * 2 * D * H * w_b
                           + (H + 3 * D) * 4),
    )

    scratch_shapes = []
    if not acc_in_output:
        scratch_shapes.append(pltpu.VMEM((tm, D), jnp.float32))
    if hoist_x_cast:
        scratch_shapes.append(pltpu.VMEM((tm, D), w_dtype))

    return pl.pallas_call(
        _make_ffn_kernel(acc_in_output, hoist_x_cast),
        out_shape=jax.ShapeDtypeStruct((Mp, D), out_dtype),
        grid_spec=pltpu.PrefetchScalarGridSpec(
            num_scalar_prefetch=0,
            grid=(n_i, n_j),
            in_specs=[
                pl.BlockSpec((tm, D), lambda i, j: (i, 0)),   # x rows (residual)
                pl.BlockSpec((D, th), lambda i, j: (0, j)),   # W1^T chunk
                pl.BlockSpec((1, th), lambda i, j: (0, j)),   # b1 chunk
                pl.BlockSpec((th, D), lambda i, j: (j, 0)),   # W2^T chunk
                pl.BlockSpec((1, D), lambda i, j: (0, 0)),    # b2
                pl.BlockSpec((1, D), lambda i, j: (0, 0)),    # gamma
                pl.BlockSpec((1, D), lambda i, j: (0, 0)),    # beta
            ],
            out_specs=pl.BlockSpec((tm, D), lambda i, j: (i, 0)),
            scratch_shapes=scratch_shapes,
        ),
        compiler_params=pltpu.CompilerParams(
            dimension_semantics=("parallel", "arbitrary"),
            vmem_limit_bytes=int(vmem_limit),
        ),
        cost_estimate=cost,
    )


def feed_forward(x, w1t, b1, w2t, b2, gamma, beta, *,
                 row_tile=None, h_tile=None, matmul_dtype=jnp.bfloat16):
    """Fused position-wise FFN + residual + LayerNorm (eval-mode dropout).

    x: (B, S, D).  w1t: (D, H), b1: (1, H), w2t: (H, D), b2/gamma/beta: (1, D).
    matmul_dtype: MXU operand dtype (bf16 default; accumulation, residual and
    LayerNorm stay in f32).  For repeated inference pass weights already cast
    to matmul_dtype so the astype below is a no-op (no per-call HBM convert).
    """
    B, S, D = x.shape
    H = w1t.shape[1]
    assert w1t.shape == (D, H) and w2t.shape == (H, D)
    assert b1.shape == (1, H) and b2.shape == (1, D)
    assert gamma.shape == (1, D) and beta.shape == (1, D)
    assert D % 128 == 0, "d_model must be a multiple of the 128-lane width"

    M = B * S
    in_dtype = x.dtype
    out_dtype = x.dtype
    w_dtype = jnp.dtype(w1t.dtype if matmul_dtype is None else matmul_dtype)

    budget = _vmem_budget_bytes()
    tm, th = _select_tiles(M, D, H, in_dtype, out_dtype, w_dtype, budget,
                           row_tile, h_tile)
    n_j = H // th
    acc_in_output = jnp.dtype(out_dtype) == jnp.dtype(jnp.float32)
    hoist_x_cast = (jnp.dtype(w_dtype) != jnp.dtype(in_dtype)) and n_j > 1

    # No-ops when the caller already supplies matmul_dtype weights.
    w1c = w1t.astype(w_dtype)
    w2c = w2t.astype(w_dtype)

    x2 = x.reshape(M, D)
    Mp = _round_up(M, tm)
    if Mp != M:
        x2 = jnp.pad(x2, ((0, Mp - M), (0, 0)))

    call = _build_ffn_call(Mp, D, H, tm, th, in_dtype, w_dtype, out_dtype,
                           acc_in_output, hoist_x_cast, budget)
    out2 = call(x2, w1c, b1, w2c, b2, gamma, beta)

    if Mp != M:
        out2 = out2[:M]
    return out2.reshape(B, S, D)


def reference(x, w1t, b1, w2t, b2, gamma, beta):
    """Pure-JAX f32 reference mirroring the PyTorch forward (eval mode)."""
    h = jnp.maximum(jnp.einsum("bsd,dh->bsh", x, w1t) + b1[0], 0.0)
    y = jnp.einsum("bsh,hd->bsd", h, w2t) + b2[0]
    z = x + y
    mean = jnp.mean(z, axis=-1, keepdims=True)
    var = jnp.mean((z - mean) ** 2, axis=-1, keepdims=True)
    return ((z - mean) * jax.lax.rsqrt(var + LN_EPS)) * gamma[0] + beta[0]


if __name__ == "__main__":
    # Small shapes consistent with the module's forward:
    #   input (batch, seq, d_model); hidden = FFN inner dim.
    B, S, D, H = 2, 8, 128, 256

    key = jax.random.PRNGKey(0)
    kx, kw1, kb1, kw2, kb2, kx2 = jax.random.split(key, 6)

    x = jax.random.normal(kx, (B, S, D), dtype=jnp.float32)

    # Conv1d weights are (out, in, 1); build them directly transposed as
    # (in, out) for x @ W with a deterministic small-scale init.
    w1t = jax.random.normal(kw1, (D, H), dtype=jnp.float32) * 0.05
    b1 = jax.random.normal(kb1, (1, H), dtype=jnp.float32) * 0.05
    w2t = jax.random.normal(kw2, (H, D), dtype=jnp.float32) * 0.05
    b2 = jax.random.normal(kb2, (1, D), dtype=jnp.float32) * 0.05
    gamma = jnp.ones((1, D), dtype=jnp.float32)   # torch LayerNorm defaults
    beta = jnp.zeros((1, D), dtype=jnp.float32)

    ref = reference(x, w1t, b1, w2t, b2, gamma, beta)

    # Pre-cast weights once (recommended usage; wrapper astype is a no-op).
    w1_bf = w1t.astype(jnp.bfloat16)
    w2_bf = w2t.astype(jnp.bfloat16)

    # 1) Default path: auto tiles (resident weights, th = H), bf16 MXU
    #    operands, f32 accumulate + residual + LayerNorm.
    out = feed_forward(x, w1_bf, b1, w2_bf, b2, gamma, beta)
    out = jax.block_until_ready(out)
    assert out.shape == (B, S, D), out.shape
    assert jnp.allclose(out, ref, atol=3e-2, rtol=3e-2), float(
        jnp.max(jnp.abs(out - ref)))

    # 2) f32 MXU operands with a multi-step (2 x 2) grid: exercises row
    #    pipelining, the streamed-weight H reduction and accumulate-into-o_ref.
    out_f32 = feed_forward(x, w1t, b1, w2t, b2, gamma, beta,
                           row_tile=8, h_tile=128, matmul_dtype=jnp.float32)
    out_f32 = jax.block_until_ready(out_f32)
    assert jnp.allclose(out_f32, ref, atol=1e-4, rtol=1e-4), float(
        jnp.max(jnp.abs(out_f32 - ref)))

    # 3) bf16 MXU operands with streamed weights: exercises the hoisted
    #    once-per-row-tile x cast into VMEM scratch.
    out_bf = feed_forward(x, w1t, b1, w2t, b2, gamma, beta,
                          row_tile=16, h_tile=128, matmul_dtype=jnp.bfloat16)
    out_bf = jax.block_until_ready(out_bf)
    assert jnp.allclose(out_bf, ref, atol=3e-2, rtol=3e-2), float(
        jnp.max(jnp.abs(out_bf - ref)))

    # 4) bf16 activations (bf16 output): exercises the separate f32
    #    accumulator scratch and the 16-row sublane tiling for bf16 blocks.
    x_bf = x.astype(jnp.bfloat16)
    ref_bf = reference(x_bf.astype(jnp.float32), w1t, b1, w2t, b2, gamma, beta)
    out_xbf = feed_forward(x_bf, w1_bf, b1, w2_bf, b2, gamma, beta)
    out_xbf = jax.block_until_ready(out_xbf)
    assert out_xbf.dtype == jnp.bfloat16
    assert jnp.allclose(out_xbf.astype(jnp.float32), ref_bf,
                        atol=5e-2, rtol=5e-2), float(
        jnp.max(jnp.abs(out_xbf.astype(jnp.float32) - ref_bf)))

    # 5) Row count not a multiple of the tile: exercises the padding path.
    x_odd = jax.random.normal(kx2, (1, 5, D), dtype=jnp.float32)
    out_odd = feed_forward(x_odd, w1_bf, b1, w2_bf, b2, gamma, beta)
    out_odd = jax.block_until_ready(out_odd)
    ref_odd = reference(x_odd, w1t, b1, w2t, b2, gamma, beta)
    assert out_odd.shape == (1, 5, D)
    assert jnp.allclose(out_odd, ref_odd, atol=3e-2, rtol=3e-2), float(
        jnp.max(jnp.abs(out_odd - ref_odd)))

    print("KERNEL_OK")
</pallas_src>

<mosaic_0001>
module attributes {stable_mosaic.version = 11 : i64} {
  func.func @ffn_kernel(%arg0: i32, %arg1: i32, %arg2: memref<16x128xf32, #tpu.memory_space<vmem>>, %arg3: memref<128x256xbf16, #tpu.memory_space<vmem>>, %arg4: memref<1x256xf32, #tpu.memory_space<vmem>>, %arg5: memref<256x128xbf16, #tpu.memory_space<vmem>>, %arg6: memref<1x128xf32, #tpu.memory_space<vmem>>, %arg7: memref<1x128xf32, #tpu.memory_space<vmem>>, %arg8: memref<1x128xf32, #tpu.memory_space<vmem>>, %arg9: memref<16x128xf32, #tpu.memory_space<vmem>>) attributes {dimension_semantics = [#tpu.dimension_semantics<parallel>, #tpu.dimension_semantics<arbitrary>], iteration_bounds = array<i64: 1, 1>, scalar_prefetch = 0 : i64, scratch_operands = 0 : i64, tpu.core_type = #tpu.core_type<tc>, window_params = [{transform_indices = @transform_0, window_bounds = array<i64: 16, 128>}, {transform_indices = @transform_1, window_bounds = array<i64: 128, 256>}, {transform_indices = @transform_2, window_bounds = array<i64: 1, 256>}, {transform_indices = @transform_3, window_bounds = array<i64: 256, 128>}, {pipeline_mode = #tpu.pipeline_mode<synchronous>, transform_indices = @transform_4, window_bounds = array<i64: 1, 128>}, {pipeline_mode = #tpu.pipeline_mode<synchronous>, transform_indices = @transform_5, window_bounds = array<i64: 1, 128>}, {pipeline_mode = #tpu.pipeline_mode<synchronous>, transform_indices = @transform_6, window_bounds = array<i64: 1, 128>}, {transform_indices = @transform_7, window_bounds = array<i64: 16, 128>}]} {
    %c0_i32 = arith.constant 0 : i32
    %0 = arith.cmpi eq, %arg1, %c0_i32 : i32
    %1 = arith.extui %0 : i1 to i32
    %c0_i32_0 = arith.constant 0 : i32
    %2 = arith.cmpi ne, %1, %c0_i32_0 : i32
    scf.if %2 {
      %cst_16 = arith.constant 0.000000e+00 : f32
      %21 = vector.broadcast %cst_16 : f32 to vector<16x128xf32>
      %c0_17 = arith.constant 0 : index
      %c0_18 = arith.constant 0 : index
      %22 = vector.load %arg9[%c0_17, %c0_18] : memref<16x128xf32, #tpu.memory_space<vmem>>, vector<16x128xf32>
      tpu.vector_store %arg9[%c0_17, %c0_18], %21 {strides = array<i32>} : memref<16x128xf32, #tpu.memory_space<vmem>>, vector<16x128xf32>,
    } else {
    }
    %c0 = arith.constant 0 : index
    %c0_1 = arith.constant 0 : index
    %3 = vector.load %arg2[%c0, %c0_1] : memref<16x128xf32, #tpu.memory_space<vmem>>, vector<16x128xf32>
    %4 = arith.truncf %3 : vector<16x128xf32> to vector<16x128xbf16>
    %c0_2 = arith.constant 0 : index
    %c0_3 = arith.constant 0 : index
    %5 = vector.load %arg3[%c0_2, %c0_3] : memref<128x256xbf16, #tpu.memory_space<vmem>>, vector<128x256xbf16>
    %cst = arith.constant dense<0.000000e+00> : vector<16x256xf32>
    %6 = tpu.matmul %4, %5, %cst {dimension_numbers = #tpu.dot_dimension_numbers<[1], [0], [0], [1], [0, 0, 1, 1], [], []>} : vector<16x128xbf16>, vector<128x256xbf16>, vector<16x256xf32> -> vector<16x256xf32>
    %c0_4 = arith.constant 0 : index
    %c0_5 = arith.constant 0 : index
    %7 = vector.load %arg4[%c0_4, %c0_5] : memref<1x256xf32, #tpu.memory_space<vmem>>, vector<1x256xf32>
    %8 = vector.broadcast %7 : vector<1x256xf32> to vector<16x256xf32>
    %9 = arith.addf %6, %8 : vector<16x256xf32>
    %cst_6 = arith.constant 0.000000e+00 : f32
    %10 = vector.broadcast %cst_6 : f32 to vector<16x256xf32>
    %11 = arith.maximumf %9, %10 : vector<16x256xf32>
    %c0_7 = arith.constant 0 : index
    %c0_8 = arith.constant 0 : index
    %12 = vector.load %arg9[%c0_7, %c0_8] : memref<16x128xf32, #tpu.memory_space<vmem>>, vector<16x128xf32>
    %13 = arith.truncf %11 : vector<16x256xf32> to vector<16x256xbf16>
    %c0_9 = arith.constant 0 : index
    %c0_10 = arith.constant 0 : index
    %14 = vector.load %arg5[%c0_9, %c0_10] : memref<256x128xbf16, #tpu.memory_space<vmem>>, vector<256x128xbf16>
    %cst_11 = arith.constant dense<0.000000e+00> : vector<16x128xf32>
    %15 = tpu.matmul %13, %14, %cst_11 {dimension_numbers = #tpu.dot_dimension_numbers<[1], [0], [0], [1], [0, 0, 1, 1], [], []>} : vector<16x256xbf16>, vector<256x128xbf16>, vector<16x128xf32> -> vector<16x128xf32>
    %16 = arith.addf %12, %15 : vector<16x128xf32>
    %c0_12 = arith.constant 0 : index
    %c0_13 = arith.constant 0 : index
    %17 = vector.load %arg9[%c0_12, %c0_13] : memref<16x128xf32, #tpu.memory_space<vmem>>, vector<16x128xf32>
    tpu.vector_store %arg9[%c0_12, %c0_13], %16 {strides = array<i32>} : memref<16x128xf32, #tpu.memory_space<vmem>>, vector<16x128xf32>,
    %c0_i32_14 = arith.constant 0 : i32
    %18 = arith.cmpi eq, %arg1, %c0_i32_14 : i32
    %19 = arith.extui %18 : i1 to i32
    %c0_i32_15 = arith.constant 0 : i32
    %20 = arith.cmpi ne, %19, %c0_i32_15 : i32
    scf.if %20 {
      %c0_16 = arith.constant 0 : index
      %c0_17 = arith.constant 0 : index
      %21 = vector.load %arg6[%c0_16, %c0_17] : memref<1x128xf32, #tpu.memory_space<vmem>>, vector<1x128xf32>
      %c0_18 = arith.constant 0 : index
      %c0_19 = arith.constant 0 : index
      %22 = vector.load %arg7[%c0_18, %c0_19] : memref<1x128xf32, #tpu.memory_space<vmem>>, vector<1x128xf32>
      %c0_20 = arith.constant 0 : index
      %c0_21 = arith.constant 0 : index
      %23 = vector.load %arg8[%c0_20, %c0_21] : memref<1x128xf32, #tpu.memory_space<vmem>>, vector<1x128xf32>
      %c0_22 = arith.constant 0 : index
      %c0_23 = arith.constant 0 : index
      %24 = vector.load %arg2[%c0_22, %c0_23] : memref<16x128xf32, #tpu.memory_space<vmem>>, vector<16x128xf32>
      %c0_24 = arith.constant 0 : index
      %c0_25 = arith.constant 0 : index
      %25 = vector.load %arg9[%c0_24, %c0_25] : memref<16x128xf32, #tpu.memory_space<vmem>>, vector<16x128xf32>
      %26 = arith.addf %24, %25 : vector<16x128xf32>
      %27 = vector.broadcast %21 : vector<1x128xf32> to vector<16x128xf32>
      %28 = arith.addf %26, %27 : vector<16x128xf32>
      %cst_26 = arith.constant dense<0.000000e+00> : vector<16xf32>
      %29 = vector.multi_reduction <add>, %28, %cst_26 [1] : vector<16x128xf32> to vector<16xf32>
      %30 = vector.shape_cast %29 : vector<16xf32> to vector<16x1xf32>
      %cst_27 = arith.constant 7.812500e-03 : f32
      %31 = vector.broadcast %cst_27 : f32 to vector<16x1xf32>
      %32 = arith.mulf %30, %31 : vector<16x1xf32>
      %33 = vector.broadcast %32 : vector<16x1xf32> to vector<16x128xf32>
      %34 = arith.subf %28, %33 : vector<16x128xf32>
      %35 = arith.mulf %34, %34 : vector<16x128xf32>
      %cst_28 = arith.constant dense<0.000000e+00> : vector<16xf32>
      %36 = vector.multi_reduction <add>, %35, %cst_28 [1] : vector<16x128xf32> to vector<16xf32>
      %37 = vector.shape_cast %36 : vector<16xf32> to vector<16x1xf32>
      %cst_29 = arith.constant 7.812500e-03 : f32
      %38 = vector.broadcast %cst_29 : f32 to vector<16x1xf32>
      %39 = arith.mulf %37, %38 : vector<16x1xf32>
      %cst_30 = arith.constant 9.99999974E-6 : f32
      %40 = vector.broadcast %cst_30 : f32 to vector<16x1xf32>
      %41 = arith.addf %39, %40 : vector<16x1xf32>
      %42 = math.rsqrt %41 : vector<16x1xf32>
      %43 = vector.broadcast %42 : vector<16x1xf32> to vector<16x128xf32>
      %44 = arith.mulf %34, %43 : vector<16x128xf32>
      %45 = vector.broadcast %22 : vector<1x128xf32> to vector<16x128xf32>
      %46 = arith.mulf %44, %45 : vector<16x128xf32>
      %47 = vector.broadcast %23 : vector<1x128xf32> to vector<16x128xf32>
      %48 = arith.addf %46, %47 : vector<16x128xf32>
      %c0_31 = arith.constant 0 : index
      %c0_32 = arith.constant 0 : index
      %49 = vector.load %arg9[%c0_31, %c0_32] : memref<16x128xf32, #tpu.memory_space<vmem>>, vector<16x128xf32>
      tpu.vector_store %arg9[%c0_31, %c0_32], %48 {strides = array<i32>} : memref<16x128xf32, #tpu.memory_space<vmem>>, vector<16x128xf32>,
    } else {
    }
    return
  }
  func.func @transform_0(%arg0: i32, %arg1: i32) -> (i32, i32) {
    %c0_i32 = arith.constant 0 : i32
    %c0_i32_0 = arith.constant 0 : i32
    return %arg0, %c0_i32 : i32, i32
  }
  func.func @transform_1(%arg0: i32, %arg1: i32) -> (i32, i32) {
    %c0_i32 = arith.constant 0 : i32
    %c0_i32_0 = arith.constant 0 : i32
    return %c0_i32, %arg1 : i32, i32
  }
  func.func @transform_2(%arg0: i32, %arg1: i32) -> (i32, i32) {
    %c0_i32 = arith.constant 0 : i32
    %c0_i32_0 = arith.constant 0 : i32
    return %c0_i32, %arg1 : i32, i32
  }
  func.func @transform_3(%arg0: i32, %arg1: i32) -> (i32, i32) {
    %c0_i32 = arith.constant 0 : i32
    %c0_i32_0 = arith.constant 0 : i32
    return %arg1, %c0_i32 : i32, i32
  }
  func.func @transform_4(%arg0: i32, %arg1: i32) -> (i32, i32) {
    %c0_i32 = arith.constant 0 : i32
    %c0_i32_0 = arith.constant 0 : i32
    %c0_i32_1 = arith.constant 0 : i32
    return %c0_i32, %c0_i32_0 : i32, i32
  }
  func.func @transform_5(%arg0: i32, %arg1: i32) -> (i32, i32) {
    %c0_i32 = arith.constant 0 : i32
    %c0_i32_0 = arith.constant 0 : i32
    %c0_i32_1 = arith.constant 0 : i32
    return %c0_i32, %c0_i32_0 : i32, i32
  }
  func.func @transform_6(%arg0: i32, %arg1: i32) -> (i32, i32) {
    %c0_i32 = arith.constant 0 : i32
    %c0_i32_0 = arith.constant 0 : i32
    %c0_i32_1 = arith.constant 0 : i32
    return %c0_i32, %c0_i32_0 : i32, i32
  }
  func.func @transform_7(%arg0: i32, %arg1: i32) -> (i32, i32) {
    %c0_i32 = arith.constant 0 : i32
    %c0_i32_0 = arith.constant 0 : i32
    return %arg0, %c0_i32 : i32, i32
  }
}

</mosaic_0001>

<llo_original>
// kernel: tpu_custom_call.1
$region0: #{tpu_custom_call.1}
  #allocation0 [shape = 'u32[]', space=smem, size = 0x4, offset = 0x4, fixed_abs, tag = 'smem constant byte address 0x4 - core index']
  #allocation1 [shape = 'u32[144,128]{1,0:T(1,128)}', space=vmem, size = 0x12000, scoped, tag = 'internal scratch']
  %s0 = inlined_call_operand.hbm [shape: f32[16,128], index: 0, kind: input, shape index: {}]
  %s1 = inlined_call_operand.hbm [shape: bf16[128,256], index: 1, kind: input, shape index: {}]
  %s2 = inlined_call_operand.vmem [shape: f32[1,256], index: 2, kind: input, shape index: {}]
  %s3 = inlined_call_operand.hbm [shape: bf16[256,128], index: 3, kind: input, shape index: {}]
  %s4 = inlined_call_operand.vmem [shape: f32[1,128], index: 4, kind: input, shape index: {}]
  %s5 = inlined_call_operand.vmem [shape: f32[1,128], index: 5, kind: input, shape index: {}]
  %s6 = inlined_call_operand.vmem [shape: f32[1,128], index: 6, kind: input, shape index: {}]
  %s7 = inlined_call_operand.hbm [shape: f32[16,128], index: 7, kind: output, shape index: {}]
  %s8 = sld [smem:[#allocation0]]
  $region58: #{tpu_custom_call.1} parent=0
    _
  %s10 = ssub.s32 1, %s8
  %s11 = scalar_select 0, %s10, %s8
  $region1: #{tpu_custom_call.1} parent=0
    #allocation2 [shape = 'u8[8192]{0}', space=vmem, size = 0x2000, scoped, tag = 'input window, operand 0, single buffered']
    #allocation3 [shape = 's32[1]{0}', space=sflag, size = 0x4, scoped, tag = 'scoped memory for tpu_custom_call.1']
    #allocation4 [shape = 's32[1]{0}', space=sflag, size = 0x4, scoped, tag = 'scoped memory for tpu_custom_call.1']
    #allocation5 [shape = 'u8[65536]{0}', space=vmem, size = 0x10000, scoped, tag = 'input window, operand 1, single buffered']
    #allocation6 [shape = 's32[1]{0}', space=sflag, size = 0x4, scoped, tag = 'scoped memory for tpu_custom_call.1']
    #allocation7 [shape = 'u8[65536]{0}', space=vmem, size = 0x10000, scoped, tag = 'input window, operand 3, single buffered']
    #allocation8 [shape = 'u8[8192]{0}', space=vmem, size = 0x2000, scoped, tag = 'output window, operand 0, single buffered']
    %12 = vsyncpa [#allocation3], 0
    %13 = vsyncpa [#allocation6], 0
    %14 = vsyncpa [#allocation4], 0
    // Predicated region
    $region2: #{tpu_custom_call.1} parent=1 // pred_check
      _
    $region3: #{tpu_custom_call.1} parent=1 // pred_check_branch
      %16 = sbr.rel (0) target = $region5
    $region4: #{tpu_custom_call.1} parent=1 // pred_region
      %s18 = ssub.s32 256, 256
      %19 = vsyncadd [#allocation3], %s18
      %s20 = sshll.u32 [#allocation2], 4
      %s21 = int_to_ptr.vmem [resolvable:$true] %s20
      %26 = dma.hbm_to_vmem [thread:$0]  %s0, 256, %s21, [#allocation3], 128, 128, 8
    $region5: #{tpu_custom_call.1} parent=1 // pred_fallthru
      _
    // Predicated region
    $region6: #{tpu_custom_call.1} parent=1 // pred_check
      _
    $region7: #{tpu_custom_call.1} parent=1 // pred_check_branch
      %28 = sbr.rel (0) target = $region9
    $region8: #{tpu_custom_call.1} parent=1 // pred_region
      %s30 = ssub.s32 2048, 2048
      %31 = vsyncadd [#allocation6], %s30
      %s32 = sshll.u32 [#allocation5], 4
      %s33 = int_to_ptr.vmem [resolvable:$true] %s32
      %38 = dma.hbm_to_vmem [thread:$0]  %s1, 2048, %s33, [#allocation6], 128, 128, 8
    $region9: #{tpu_custom_call.1} parent=1 // pred_fallthru
      _
    // Predicated region
    $region10: #{tpu_custom_call.1} parent=1 // pred_check
      _
    $region11: #{tpu_custom_call.1} parent=1 // pred_check_branch
      %40 = sbr.rel (0) target = $region13
    $region12: #{tpu_custom_call.1} parent=1 // pred_region
      _
    $region13: #{tpu_custom_call.1} parent=1 // pred_fallthru
      _
    // Predicated region
    $region14: #{tpu_custom_call.1} parent=1 // pred_check
      _
    $region15: #{tpu_custom_call.1} parent=1 // pred_check_branch
      %42 = sbr.rel (0) target = $region17
    $region16: #{tpu_custom_call.1} parent=1 // pred_region
      %s44 = ssub.s32 2048, 2048
      %45 = vsyncadd [#allocation6], %s44
      %s46 = sshll.u32 [#allocation7], 4
      %s47 = int_to_ptr.vmem [resolvable:$true] %s46
      %52 = dma.hbm_to_vmem [thread:$0]  %s3, 2048, %s47, [#allocation6], 64, 64, 4
    $region17: #{tpu_custom_call.1} parent=1 // pred_fallthru
      _
    // Predicated region
    $region18: #{tpu_custom_call.1} parent=1 // pred_check
      _
    $region19: #{tpu_custom_call.1} parent=1 // pred_check_branch
      %54 = sbr.rel (0) target = $region21
    $region20: #{tpu_custom_call.1} parent=1 // pred_region
      _
    $region21: #{tpu_custom_call.1} parent=1 // pred_fallthru
      _
    // Predicated region
    $region22: #{tpu_custom_call.1} parent=1 // pred_check
      _
    $region23: #{tpu_custom_call.1} parent=1 // pred_check_branch
      %56 = sbr.rel (0) target = $region25
    $region24: #{tpu_custom_call.1} parent=1 // pred_region
      _
    $region25: #{tpu_custom_call.1} parent=1 // pred_fallthru
      _
    // Predicated region
    $region26: #{tpu_custom_call.1} parent=1 // pred_check
      _
    $region27: #{tpu_custom_call.1} parent=1 // pred_check_branch
      %58 = sbr.rel (0) target = $region29
    $region28: #{tpu_custom_call.1} parent=1 // pred_region
      _
    $region29: #{tpu_custom_call.1} parent=1 // pred_fallthru
      _
    // Predicated region
    $region30: #{tpu_custom_call.1} parent=1 // pred_check
      _
    $region31: #{tpu_custom_call.1} parent=1 // pred_check_branch
      %60 = sbr.rel (0) target = $region33
    $region32: #{tpu_custom_call.1} parent=1 // pred_region
      %61 = dma.done [#allocation3], 256
    $region33: #{tpu_custom_call.1} parent=1 // pred_fallthru
      _
    // Predicated region
    $region34: #{tpu_custom_call.1} parent=1 // pred_check
      _
    $region35: #{tpu_custom_call.1} parent=1 // pred_check_branch
      %63 = sbr.rel (0) target = $region37
    $region36: #{tpu_custom_call.1} parent=1 // pred_region
      %64 = dma.done [#allocation6], 2048
    $region37: #{tpu_custom_call.1} parent=1 // pred_fallthru
      _
    // Predicated region
    $region38: #{tpu_custom_call.1} parent=1 // pred_check
      _
    $region39: #{tpu_custom_call.1} parent=1 // pred_check_branch
      %66 = sbr.rel (0) target = $region41
    $region40: #{tpu_custom_call.1} parent=1 // pred_region
      %67 = dma.done [#allocation6], 2048
    $region41: #{tpu_custom_call.1} parent=1 // pred_fallthru
      _
    %p69 = scmp.eq.s32.totalorder 0, 0
    // Predicated region
    $region42: #{tpu_custom_call.1} parent=1 // pred_check
      %p70 = pneg %p69
    $region43: #{tpu_custom_call.1} parent=1 // pred_check_branch
      %72 = sbr.rel (%p70) target = $region45
    $region44: #{tpu_custom_call.1} parent=1 // pred_region
      %73 = vst [vmem:[#allocation8] sm:$0xff] 0.0
      %74 = vst [vmem:[#allocation8 + $0x8] sm:$0xff] 0.0
    $region45: #{tpu_custom_call.1} parent=1 // pred_fallthru
      _
    %v75 = vld [vmem:[#allocation2] sm:$0xff]
    %v76 = vld [vmem:[#allocation2 + $0x8] sm:$0xff]
    %v77 = vpack.c.bf16 %v76, %v75
    %v78 = vld [vmem:[#allocation5] sm:$0xff]
    %v79 = vld [vmem:[#allocation5 + $0x8] sm:$0xff]
    %v80 = vld [vmem:[#allocation5 + $0x10] sm:$0xff]
    %v81 = vld [vmem:[#allocation5 + $0x18] sm:$0xff]
    %v82 = vld [vmem:[#allocation5 + $0x20] sm:$0xff]
    %v83 = vld [vmem:[#allocation5 + $0x28] sm:$0xff]
    %v84 = vld [vmem:[#allocation5 + $0x30] sm:$0xff]
    %v85 = vld [vmem:[#allocation5 + $0x38] sm:$0xff]
    %v86 = vld [vmem:[#allocation5 + $0x40] sm:$0xff]
    %v87 = vld [vmem:[#allocation5 + $0x48] sm:$0xff]
    %v88 = vld [vmem:[#allocation5 + $0x50] sm:$0xff]
    %v89 = vld [vmem:[#allocation5 + $0x58] sm:$0xff]
    %v90 = vld [vmem:[#allocation5 + $0x60] sm:$0xff]
    %v91 = vld [vmem:[#allocation5 + $0x68] sm:$0xff]
    %v92 = vld [vmem:[#allocation5 + $0x70] sm:$0xff]
    %v93 = vld [vmem:[#allocation5 + $0x78] sm:$0xff]
    %v94 = vld [vmem:[%s2] sm:$0x3]
    %v96 = vlaneseq
    %v97 = vshrl.u32 %v96, 7
    %v98 = vsub.s32 0, %v97
    %v99 = vrot.slane %v94, %v98
    %v100 = vlaneseq
    %v101 = vshrl.u32 %v100, 7
    %v102 = vsub.s32 1, %v101
    %v103 = vrot.slane %v94, %v102
    %v122 = vunpack.c.l.b16 %v78
    %v123 = vunpack.c.h.b16 %v78
    %v124 = vunpack.c.l.b16 %v79
    %v125 = vunpack.c.h.b16 %v79
    %v126 = vunpack.c.l.b16 %v80
    %v127 = vunpack.c.h.b16 %v80
    %v128 = vunpack.c.l.b16 %v81
    %v129 = vunpack.c.h.b16 %v81
    %v130 = vunpack.c.l.b16 %v82
    %v131 = vunpack.c.h.b16 %v82
    %v132 = vunpack.c.l.b16 %v83
    %v133 = vunpack.c.h.b16 %v83
    %v134 = vunpack.c.l.b16 %v84
    %v135 = vunpack.c.h.b16 %v84
    %v136 = vunpack.c.l.b16 %v85
    %v137 = vunpack.c.h.b16 %v85
    %v138 = vunpack.c.l.b16 %v86
    %v139 = vunpack.c.h.b16 %v86
    %v140 = vunpack.c.l.b16 %v87
    %v141 = vunpack.c.h.b16 %v87
    %v142 = vunpack.c.l.b16 %v88
    %v143 = vunpack.c.h.b16 %v88
    %v144 = vunpack.c.l.b16 %v89
    %v145 = vunpack.c.h.b16 %v89
    %v146 = vunpack.c.l.b16 %v90
    %v147 = vunpack.c.h.b16 %v90
    %v148 = vunpack.c.l.b16 %v91
    %v149 = vunpack.c.h.b16 %v91
    %v150 = vunpack.c.l.b16 %v92
    %v151 = vunpack.c.h.b16 %v92
    %v152 = vunpack.c.l.b16 %v93
    %v153 = vunpack.c.h.b16 %v93
    %v154 = vpack.c.b16 %v124, %v122
    %v155 = vpack.c.b16 %v125, %v123
    %v156 = vpack.c.b16 %v128, %v126
    %v157 = vpack.c.b16 %v129, %v127
    %v158 = vpack.c.b16 %v132, %v130
    %v159 = vpack.c.b16 %v133, %v131
    %v160 = vpack.c.b16 %v136, %v134
    %v161 = vpack.c.b16 %v137, %v135
    %v162 = vpack.c.b16 %v140, %v138
    %v163 = vpack.c.b16 %v141, %v139
    %v164 = vpack.c.b16 %v144, %v142
    %v165 = vpack.c.b16 %v145, %v143
    %v166 = vpack.c.b16 %v148, %v146
    %v167 = vpack.c.b16 %v149, %v147
    %v168 = vpack.c.b16 %v152, %v150
    %v169 = vpack.c.b16 %v153, %v151
    %186 = vmatprep.subr.bf16.mxu0 %v155
    %187 = vmatpush1.bf16.msra.mxu0 %v154
    %188 = vmatprep.subr.bf16.mxu0 %v157
    %189 = vmatpush1.bf16.msra.mxu0 %v156
    %190 = vmatprep.subr.bf16.mxu0 %v159
    %191 = vmatpush1.bf16.msra.mxu0 %v158
    %192 = vmatprep.subr.bf16.mxu0 %v161
    %193 = vmatpush1.bf16.msra.mxu0 %v160
    %194 = vmatprep.subr.bf16.mxu0 %v163
    %195 = vmatpush1.bf16.msra.mxu0 %v162
    %196 = vmatprep.subr.bf16.mxu0 %v165
    %197 = vmatpush1.bf16.msra.mxu0 %v164
    %198 = vmatprep.subr.bf16.mxu0 %v167
    %199 = vmatpush1.bf16.msra.mxu0 %v166
    %200 = vmatprep.subr.bf16.mxu0 %v169
    %201 = vmatpush1.bf16.msra.mxu0 %v168
    %202 = vmatprep.subr.bf16.mxu0 0
    %203 = vmatpush1.bf16.msra.mxu0 0
    %204 = vmatprep.subr.bf16.mxu0 0
    %205 = vmatpush1.bf16.msra.mxu0 0
    %206 = vmatprep.subr.bf16.mxu0 0
    %207 = vmatpush1.bf16.msra.mxu0 0
    %208 = vmatprep.subr.bf16.mxu0 0
    %209 = vmatpush1.bf16.msra.mxu0 0
    %210 = vmatprep.subr.bf16.mxu0 0
    %211 = vmatpush1.bf16.msra.mxu0 0
    %212 = vmatprep.subr.bf16.mxu0 0
    %213 = vmatpush1.bf16.msra.mxu0 0
    %214 = vmatprep.subr.bf16.mxu0 0
    %215 = vmatpush1.bf16.msra.mxu0 0
    %216 = vmatprep.subr.bf16.mxu0 0
    %217 = vmatpush1.bf16.msra.mxu0 0
    %218 = vmatprep.mubr.bf16.mxu0 0
    %219 = vmatmul.mubr.bf16.gmra.mrb[0].mxu0 %v77
    %v220 = vpop.f32.mrb[0].mxu0
    %v221 = vadd.f32 %v99, %v220
    %v222 = vpop.f32.mrb[0].mxu0
    %v223 = vadd.f32 %v103, %v222
    %v224 = vpop.f32.mrb[0].mxu0
    %v225 = vadd.f32 %v99, %v224
    %v226 = vpop.f32.mrb[0].mxu0
    %v227 = vadd.f32 %v103, %v226
    %228 = vdwg.mxu0
    %v229 = vmax.f32 %v221, 0.0
    %v230 = vmax.f32 %v223, 0.0
    %v231 = vmax.f32 %v225, 0.0
    %v232 = vmax.f32 %v227, 0.0
    %v233 = vld [vmem:[#allocation8] sm:$0xff]
    %v234 = vld [vmem:[#allocation8 + $0x8] sm:$0xff]
    %v235 = vpack.c.bf16 %v231, %v229
    %v236 = vpack.c.bf16 %v232, %v230
    %v237 = vld [vmem:[#allocation7] sm:$0xf]
    %v238 = vld [vmem:[#allocation7 + $0x4] sm:$0xf]
    %v239 = vld [vmem:[#allocation7 + $0x8] sm:$0xf]
    %v240 = vld [vmem:[#allocation7 + $0xc] sm:$0xf]
    %v241 = vld [vmem:[#allocation7 + $0x10] sm:$0xf]
    %v242 = vld [vmem:[#allocation7 + $0x14] sm:$0xf]
    %v243 = vld [vmem:[#allocation7 + $0x18] sm:$0xf]
    %v244 = vld [vmem:[#allocation7 + $0x1c] sm:$0xf]
    %v245 = vld [vmem:[#allocation7 + $0x20] sm:$0xf]
    %v246 = vld [vmem:[#allocation7 + $0x24] sm:$0xf]
    %v247 = vld [vmem:[#allocation7 + $0x28] sm:$0xf]
    %v248 = vld [vmem:[#allocation7 + $0x2c] sm:$0xf]
    %v249 = vld [vmem:[#allocation7 + $0x30] sm:$0xf]
    %v250 = vld [vmem:[#allocation7 + $0x34] sm:$0xf]
    %v251 = vld [vmem:[#allocation7 + $0x38] sm:$0xf]
    %v252 = vld [vmem:[#allocation7 + $0x3c] sm:$0xf]
    %v253 = vld [vmem:[#allocation7 + $0x40] sm:$0xf]
    %v254 = vld [vmem:[#allocation7 + $0x44] sm:$0xf]
    %v255 = vld [vmem:[#allocation7 + $0x48] sm:$0xf]
    %v256 = vld [vmem:[#allocation7 + $0x4c] sm:$0xf]
    %v257 = vld [vmem:[#allocation7 + $0x50] sm:$0xf]
    %v258 = vld [vmem:[#allocation7 + $0x54] sm:$0xf]
    %v259 = vld [vmem:[#allocation7 + $0x58] sm:$0xf]
    %v260 = vld [vmem:[#allocation7 + $0x5c] sm:$0xf]
    %v261 = vld [vmem:[#allocation7 + $0x60] sm:$0xf]
    %v262 = vld [vmem:[#allocation7 + $0x64] sm:$0xf]
    %v263 = vld [vmem:[#allocation7 + $0x68] sm:$0xf]
    %v264 = vld [vmem:[#allocation7 + $0x6c] sm:$0xf]
    %v265 = vld [vmem:[#allocation7 + $0x70] sm:$0xf]
    %v266 = vld [vmem:[#allocation7 + $0x74] sm:$0xf]
    %v267 = vld [vmem:[#allocation7 + $0x78] sm:$0xf]
    %v268 = vld [vmem:[#allocation7 + $0x7c] sm:$0xf]
    %v301 = vunpack.c.l.b16 %v237
    %v302 = vunpack.c.l.b16 %v238
    %v303 = vunpack.c.l.b16 %v239
    %v304 = vunpack.c.l.b16 %v240
    %v305 = vunpack.c.l.b16 %v241
    %v306 = vunpack.c.l.b16 %v242
    %v307 = vunpack.c.l.b16 %v243
    %v308 = vunpack.c.l.b16 %v244
    %v309 = vunpack.c.l.b16 %v245
    %v310 = vunpack.c.l.b16 %v246
    %v311 = vunpack.c.l.b16 %v247
    %v312 = vunpack.c.l.b16 %v248
    %v313 = vunpack.c.l.b16 %v249
    %v314 = vunpack.c.l.b16 %v250
    %v315 = vunpack.c.l.b16 %v251
    %v316 = vunpack.c.l.b16 %v252
    %v317 = vunpack.c.l.b16 %v253
    %v318 = vunpack.c.l.b16 %v254
    %v319 = vunpack.c.l.b16 %v255
    %v320 = vunpack.c.l.b16 %v256
    %v321 = vunpack.c.l.b16 %v257
    %v322 = vunpack.c.l.b16 %v258
    %v323 = vunpack.c.l.b16 %v259
    %v324 = vunpack.c.l.b16 %v260
    %v325 = vunpack.c.l.b16 %v261
    %v326 = vunpack.c.l.b16 %v262
    %v327 = vunpack.c.l.b16 %v263
    %v328 = vunpack.c.l.b16 %v264
    %v329 = vunpack.c.l.b16 %v265
    %v330 = vunpack.c.l.b16 %v266
    %v331 = vunpack.c.l.b16 %v267
    %v332 = vunpack.c.l.b16 %v268
    %v333 = vpack.c.b16 %v302, %v301
    %v334 = vpack.c.b16 %v304, %v303
    %v335 = vpack.c.b16 %v306, %v305
    %v336 = vpack.c.b16 %v308, %v307
    %v337 = vpack.c.b16 %v310, %v309
    %v338 = vpack.c.b16 %v312, %v311
    %v339 = vpack.c.b16 %v314, %v313
    %v340 = vpack.c.b16 %v316, %v315
    %v341 = vpack.c.b16 %v318, %v317
    %v342 = vpack.c.b16 %v320, %v319
    %v343 = vpack.c.b16 %v322, %v321
    %v344 = vpack.c.b16 %v324, %v323
    %v345 = vpack.c.b16 %v326, %v325
    %v346 = vpack.c.b16 %v328, %v327
    %v347 = vpack.c.b16 %v330, %v329
    %v348 = vpack.c.b16 %v332, %v331
    %365 = vmatprep.subr.bf16.mxu0 0
    %366 = vmatpush1.bf16.msra.mxu0 %v333
    %367 = vmatprep.subr.bf16.mxu0 0
    %368 = vmatpush1.bf16.msra.mxu0 %v334
    %369 = vmatprep.subr.bf16.mxu0 0
    %370 = vmatpush1.bf16.msra.mxu0 %v335
    %371 = vmatprep.subr.bf16.mxu0 0
    %372 = vmatpush1.bf16.msra.mxu0 %v336
    %373 = vmatprep.subr.bf16.mxu0 0
    %374 = vmatpush1.bf16.msra.mxu0 %v337
    %375 = vmatprep.subr.bf16.mxu0 0
    %376 = vmatpush1.bf16.msra.mxu0 %v338
    %377 = vmatprep.subr.bf16.mxu0 0
    %378 = vmatpush1.bf16.msra.mxu0 %v339
    %379 = vmatprep.subr.bf16.mxu0 0
    %380 = vmatpush1.bf16.msra.mxu0 %v340
    %381 = vmatprep.subr.bf16.mxu0 0
    %382 = vmatpush1.bf16.msra.mxu0 %v341
    %383 = vmatprep.subr.bf16.mxu0 0
    %384 = vmatpush1.bf16.msra.mxu0 %v342
    %385 = vmatprep.subr.bf16.mxu0 0
    %386 = vmatpush1.bf16.msra.mxu0 %v343
    %387 = vmatprep.subr.bf16.mxu0 0
    %388 = vmatpush1.bf16.msra.mxu0 %v344
    %389 = vmatprep.subr.bf16.mxu0 0
    %390 = vmatpush1.bf16.msra.mxu0 %v345
    %391 = vmatprep.subr.bf16.mxu0 0
    %392 = vmatpush1.bf16.msra.mxu0 %v346
    %393 = vmatprep.subr.bf16.mxu0 0
    %394 = vmatpush1.bf16.msra.mxu0 %v347
    %395 = vmatprep.subr.bf16.mxu0 0
    %396 = vmatpush1.bf16.msra.mxu0 %v348
    %397 = vmatprep.mubr.bf16.mxu0 %v236
    %398 = vmatmul.mubr.bf16.gmra.mrb[0].mxu0 %v235
    %v399 = vpop.f32.mrb[0].mxu0
    %v400 = vadd.f32 0.0, %v399
    %v401 = vpop.f32.mrb[0].mxu0
    %v402 = vpop.f32.mrb[0].mxu0
    %v403 = vadd.f32 0.0, %v402
    %v404 = vpop.f32.mrb[0].mxu0
    %405 = vdwg.mxu0
    %v406 = vadd.f32 %v233, %v400
    %v407 = vadd.f32 %v234, %v403
    %408 = vst [vmem:[#allocation8] sm:$0xff] %v406
    %409 = vst [vmem:[#allocation8 + $0x8] sm:$0xff] %v407
    // Predicated region
    $region46: #{tpu_custom_call.1} parent=1 // pred_check
      %p410 = pneg %p69
    $region47: #{tpu_custom_call.1} parent=1 // pred_check_branch
      %412 = sbr.rel (%p410) target = $region49
    $region48: #{tpu_custom_call.1} parent=1 // pred_region
      %v413 = vld [vmem:[%s4] sm:$0x1]
      %v414 = vld [vmem:[%s5] sm:$0x1]
      %v415 = vld [vmem:[%s6] sm:$0x1]
      %v416 = vld [vmem:[#allocation2] sm:$0xff]
      %v417 = vld [vmem:[#allocation2 + $0x8] sm:$0xff]
      %v418 = vld [vmem:[#allocation8] sm:$0xff]
      %v419 = vld [vmem:[#allocation8 + $0x8] sm:$0xff]
      %v420 = vadd.f32 %v416, %v418
      %v421 = vadd.f32 %v417, %v419
      %v423 = vlaneseq
      %v424 = vshrl.u32 %v423, 7
      %v425 = vsub.s32 0, %v424
      %v426 = vrot.slane %v413, %v425
      %v428 = vadd.f32 %v420, %v426
      %v429 = vadd.f32 %v421, %v426
      %430 = vadd.xlane.f32.xlu0 %v428
      %v431 = vpop.xlane.xlu0 %430
      %432 = vadd.xlane.f32.xlu0 %v429
      %v433 = vpop.xlane.xlu0 %432
      %v434 = vmul.f32 %v431, 0.0078125
      %v435 = vmul.f32 %v433, 0.0078125
      %v436 = vsub.f32 %v428, %v434
      %v437 = vsub.f32 %v429, %v435
      %v438 = vmul.f32 %v436, %v436
      %v439 = vmul.f32 %v437, %v437
      %440 = vadd.xlane.f32.xlu0 %v438
      %v441 = vpop.xlane.xlu0 %440
      %442 = vadd.xlane.f32.xlu0 %v439
      %v443 = vpop.xlane.xlu0 %442
      %v444 = vmul.f32 %v441, 0.0078125
      %v445 = vmul.f32 %v443, 0.0078125
      %v446 = vadd.f32 %v444, 1e-05
      %v447 = vadd.f32 %v445, 1e-05
      %v448 = vrsqrt.pop %v446
      %v449 = vrsqrt.pop %v447
      %v450 = vmul.f32 %v436, %v448
      %v451 = vmul.f32 %v437, %v449
      %v453 = vlaneseq
      %v454 = vshrl.u32 %v453, 7
      %v455 = vsub.s32 0, %v454
      %v456 = vrot.slane %v414, %v455
      %v458 = vmul.f32 %v450, %v456
      %v459 = vmul.f32 %v451, %v456
      %v461 = vlaneseq
      %v462 = vshrl.u32 %v461, 7
      %v463 = vsub.s32 0, %v462
      %v464 = vrot.slane %v415, %v463
      %v466 = vadd.f32 %v458, %v464
      %v467 = vadd.f32 %v459, %v464
      %468 = vst [vmem:[#allocation8] sm:$0xff] %v466
      %469 = vst [vmem:[#allocation8 + $0x8] sm:$0xff] %v467
    $region49: #{tpu_custom_call.1} parent=1 // pred_fallthru
      _
    // Predicated region
    $region50: #{tpu_custom_call.1} parent=1 // pred_check
      _
    $region51: #{tpu_custom_call.1} parent=1 // pred_check_branch
      %471 = sbr.rel (0) target = $region53
    $region52: #{tpu_custom_call.1} parent=1 // pred_region
      %s473 = ssub.s32 256, 256
      %474 = vsyncadd [#allocation4], %s473
      %s475 = sshll.u32 [#allocation8], 4
      %s476 = int_to_ptr.vmem [resolvable:$true] %s475
      %481 = dma.vmem_to_hbm [thread:$0]  %s476, 256, %s7, [#allocation4], 128, 128, 8
    $region53: #{tpu_custom_call.1} parent=1 // pred_fallthru
      _
    // Predicated region
    $region54: #{tpu_custom_call.1} parent=1 // pred_check
      _
    $region55: #{tpu_custom_call.1} parent=1 // pred_check_branch
      %483 = sbr.rel (0) target = $region57
    $region56: #{tpu_custom_call.1} parent=1 // pred_region
      %484 = dma.done [#allocation4], 256
    $region57: #{tpu_custom_call.1} parent=1 // pred_fallthru
      _
    %485 = vsyncpa [#allocation3], 1
    %486 = vsyncpa [#allocation6], 1
    %487 = vsyncpa [#allocation4], 1

</llo_original>
